<compile_context>
chip_gen: v5e
topology: v5e:2x2
jax: 0.10.0
libtpu: 0.0.40
codegen_flags: <defaults>
</compile_context>

<pallas_src>
import jax
import jax.numpy as jnp
from jax.experimental import pallas as pl
from jax.experimental.pallas import tpu as pltpu

_LN2 = 0.6931471805599453


def _logcosh_gate_kernel(x_ref, o_ref):
    x = x_ref[...].astype(jnp.float32)
    ax = jnp.abs(x)
    # log(cosh(x)) = |x| + log1p(exp(-2|x|)) - log(2)
    # 2 EUP pushes (exp + log1p), no overflow for |x| > ~88 in f32.
    t = jnp.exp(-2.0 * ax)                      # t in (0, 1]
    logcosh = ax + jnp.log1p(t) - _LN2
    o_ref[...] = (x * logcosh).astype(o_ref.dtype)


def _pick_layout(total, sub):
    """Factor `total` into (rows, w): w a multiple of 128, preferring a
    factorization with rows % sub == 0 (vreg-dense sublanes), then the widest
    lane dim.  Returns None if total is not a multiple of 128."""
    best = None
    for w in (1024, 512, 256, 128):
        if total % w == 0:
            rows = total // w
            if rows % sub == 0:
                return rows, w          # dense sublanes, widest such w
            if best is None:
                best = (rows, w)        # widest fallback (partial sublanes)
    return best


def logcosh_gate(x: jax.Array, *, target_block_bytes: int = 2 << 20) -> jax.Array:
    """f(x) = x * log(cosh(x) + 1e-7) elementwise via a Pallas TPU kernel."""
    orig_shape = x.shape
    dtype = x.dtype
    total = x.size
    if total == 0:
        return x
    itemsize = jnp.dtype(dtype).itemsize
    sub = 8 if itemsize >= 4 else 16    # sublane multiple (bf16 packs 16)

    x_flat = x.reshape(-1)

    layout = _pick_layout(total, sub) if total % 128 == 0 else None
    if layout is not None:
        rows, w = layout
        padded_total = total            # exact factorization: no pad, no slice
    else:
        # Ragged fallback (total % 128 != 0): minimal pad to a 128-lane slab.
        # Only this path pays an extra pad/slice copy.
        w = 128
        rows = pl.cdiv(total, w)
        padded_total = rows * w
        x_flat = jnp.pad(x_flat, (0, padded_total - total))

    x2d = x_flat.reshape(rows, w)

    # Block row count: target ~2 MiB blocks. Partial last block (when tr does
    # not divide rows) is handled by Pallas masking -- no padding needed.
    tr_cap = max(sub, (target_block_bytes // (w * itemsize)) // sub * sub)
    if rows > tr_cap:
        tr = tr_cap
    elif rows >= 2 * sub and rows * w * itemsize >= (1 << 20):
        # Mid-size input that would fit one block: use >= 2 grid steps so both
        # v7x TensorCores can stream (grid axis is "parallel").
        tr = pl.cdiv(pl.cdiv(rows, 2), sub) * sub
    else:
        tr = rows                       # single block == full array dims

    grid = (pl.cdiv(rows, tr),)

    out2d = pl.pallas_call(
        _logcosh_gate_kernel,
        out_shape=jax.ShapeDtypeStruct((rows, w), dtype),
        grid=grid,
        in_specs=[pl.BlockSpec((tr, w), lambda i: (i, 0))],
        out_specs=pl.BlockSpec((tr, w), lambda i: (i, 0)),
        compiler_params=pltpu.CompilerParams(
            dimension_semantics=("parallel",)),
        cost_estimate=pl.CostEstimate(
            flops=6 * total,
            transcendentals=2 * total,
            bytes_accessed=2 * total * itemsize),
    )(x2d)

    out_flat = out2d.reshape(-1)
    if padded_total != total:
        out_flat = out_flat[:total]
    return out_flat.reshape(orig_shape)


if __name__ == "__main__":
    key = jax.random.PRNGKey(0)
    x = jax.random.normal(key, (2, 4, 16, 16), dtype=jnp.float32)

    y = jax.block_until_ready(logcosh_gate(x))

    # Reference check against the exact torch formula (plain JAX).
    y_ref = x * jnp.log(jnp.cosh(x) + 1e-7)
    assert y.shape == x.shape and y.dtype == x.dtype
    assert jnp.allclose(y, y_ref, atol=1e-6, rtol=1e-5), "mismatch vs reference"

    print("KERNEL_OK")
</pallas_src>

<mosaic_0001>
module attributes {stable_mosaic.version = 11 : i64} {
  func.func @_logcosh_gate_kernel(%arg0: i32, %arg1: memref<8x256xf32, #tpu.memory_space<vmem>>, %arg2: memref<8x256xf32, #tpu.memory_space<vmem>>) attributes {dimension_semantics = [#tpu.dimension_semantics<parallel>], iteration_bounds = array<i64: 1>, scalar_prefetch = 0 : i64, scratch_operands = 0 : i64, tpu.core_type = #tpu.core_type<tc>, window_params = [{transform_indices = @transform_0, window_bounds = array<i64: 8, 256>}, {transform_indices = @transform_1, window_bounds = array<i64: 8, 256>}]} {
    %c0 = arith.constant 0 : index
    %c0_0 = arith.constant 0 : index
    %0 = vector.load %arg1[%c0, %c0_0] : memref<8x256xf32, #tpu.memory_space<vmem>>, vector<8x256xf32>
    %1 = math.absf %0 : vector<8x256xf32>
    %cst = arith.constant -2.000000e+00 : f32
    %2 = vector.broadcast %cst : f32 to vector<8x256xf32>
    %3 = arith.mulf %2, %1 : vector<8x256xf32>
    %4 = math.exp %3 : vector<8x256xf32>
    %5 = math.log1p %4 : vector<8x256xf32>
    %6 = arith.addf %1, %5 : vector<8x256xf32>
    %cst_1 = arith.constant 0.693147182 : f32
    %7 = vector.broadcast %cst_1 : f32 to vector<8x256xf32>
    %8 = arith.subf %6, %7 : vector<8x256xf32>
    %9 = arith.mulf %0, %8 : vector<8x256xf32>
    %c0_2 = arith.constant 0 : index
    %c0_3 = arith.constant 0 : index
    %10 = vector.load %arg2[%c0_2, %c0_3] : memref<8x256xf32, #tpu.memory_space<vmem>>, vector<8x256xf32>
    tpu.vector_store %arg2[%c0_2, %c0_3], %9 {strides = array<i32>} : memref<8x256xf32, #tpu.memory_space<vmem>>, vector<8x256xf32>,
    return
  }
  func.func @transform_0(%arg0: i32) -> (i32, i32) {
    %c0_i32 = arith.constant 0 : i32
    %c0_i32_0 = arith.constant 0 : i32
    return %arg0, %c0_i32 : i32, i32
  }
  func.func @transform_1(%arg0: i32) -> (i32, i32) {
    %c0_i32 = arith.constant 0 : i32
    %c0_i32_0 = arith.constant 0 : i32
    return %arg0, %c0_i32 : i32, i32
  }
}

</mosaic_0001>

<llo_original>
// kernel: tpu_custom_call.1
$region0: #{tpu_custom_call.1}
  #allocation0 [shape = 'u32[]', space=smem, size = 0x4, offset = 0x4, fixed_abs, tag = 'smem constant byte address 0x4 - core index']
  #allocation1 [shape = 'u32[72,128]{1,0:T(1,128)}', space=vmem, size = 0x9000, scoped, tag = 'internal scratch']
  %s0 = inlined_call_operand.hbm [shape: f32[8,256], index: 0, kind: input, shape index: {}]
  %s1 = inlined_call_operand.hbm [shape: f32[8,256], index: 1, kind: output, shape index: {}]
  %s2 = sld [smem:[#allocation0]]
  $region18: #{tpu_custom_call.1} parent=0
    _
  %s4 = ssub.s32 1, %s2
  %s5 = scalar_select 0, %s4, %s2
  $region1: #{tpu_custom_call.1} parent=0
    #allocation2 [shape = 'u8[8192]{0}', space=vmem, size = 0x2000, scoped, tag = 'input window, operand 0, single buffered']
    #allocation3 [shape = 's32[1]{0}', space=sflag, size = 0x4, scoped, tag = 'scoped memory for tpu_custom_call.1']
    #allocation4 [shape = 's32[1]{0}', space=sflag, size = 0x4, scoped, tag = 'scoped memory for tpu_custom_call.1']
    #allocation5 [shape = 'u8[8192]{0}', space=vmem, size = 0x2000, scoped, tag = 'output window, operand 0, single buffered']
    %6 = vsyncpa [#allocation3], 0
    %7 = vsyncpa [#allocation4], 0
    // Predicated region
    $region2: #{tpu_custom_call.1} parent=1 // pred_check
      _
    $region3: #{tpu_custom_call.1} parent=1 // pred_check_branch
      %9 = sbr.rel (0) target = $region5
    $region4: #{tpu_custom_call.1} parent=1 // pred_region
      %11 = vsyncadd [#allocation3], 0
      %s13 = sshll.u32 %s0, 4
      %s14 = int_to_ptr.hbm [resolvable:$true] %s13
      %s15 = sshll.u32 [#allocation2], 4
      %s16 = int_to_ptr.vmem [resolvable:$true] %s15
      %18 = dma.hbm_to_vmem [thread:$0]  %s14, 256, %s16, [#allocation3]
    $region5: #{tpu_custom_call.1} parent=1 // pred_fallthru
      _
    // Predicated region
    $region6: #{tpu_custom_call.1} parent=1 // pred_check
      _
    $region7: #{tpu_custom_call.1} parent=1 // pred_check_branch
      %20 = sbr.rel (0) target = $region9
    $region8: #{tpu_custom_call.1} parent=1 // pred_region
      %22 = dma.done [#allocation3], 256
    $region9: #{tpu_custom_call.1} parent=1 // pred_fallthru
      _
    %v23 = vld [vmem:[#allocation2] sm:$0xff]
    %v24 = vld [vmem:[#allocation2 + $0x8] sm:$0xff]
    %v25 = vand.u32 2147483647, %v23
    %v26 = vand.u32 2147483647, %v24
    %v27 = vmul.f32 %v25, -2.0
    %v28 = vmul.f32 %v26, -2.0
    %v29 = vmul.f32 %v27, 1.442695
    %v30 = vpow.pop %v29
    %v31 = vmul.f32 %v28, 1.442695
    %v32 = vpow.pop %v31
    %v33 = vadd.f32 %v30, 1.0
    %v34 = vlog2.pop %v33
    %v35 = vmul.f32 %v34, 0.6931472
    %v36 = vmul.f32 -0.5, %v30
    %v37 = vadd.f32 %v36, 1.0
    %v38 = vmul.f32 %v37, %v30
    %v39 = vand.u32 2147483647, %v30
    %vm40 = vcmp.lt.f32.partialorder %v39, 0.0004427343
    %v41 = vsel %vm40, %v38, %v35
    %v42 = vadd.f32 %v32, 1.0
    %v43 = vlog2.pop %v42
    %v44 = vmul.f32 %v43, 0.6931472
    %v45 = vmul.f32 -0.5, %v32
    %v46 = vadd.f32 %v45, 1.0
    %v47 = vmul.f32 %v46, %v32
    %v48 = vand.u32 2147483647, %v32
    %vm49 = vcmp.lt.f32.partialorder %v48, 0.0004427343
    %v50 = vsel %vm49, %v47, %v44
    %v51 = vadd.f32 %v25, %v41
    %v52 = vadd.f32 %v26, %v50
    %v53 = vsub.f32 %v51, 0.6931472
    %v54 = vsub.f32 %v52, 0.6931472
    %v55 = vmul.f32 %v23, %v53
    %v56 = vmul.f32 %v24, %v54
    %57 = vst [vmem:[#allocation5] sm:$0xff] %v55
    %58 = vst [vmem:[#allocation5 + $0x8] sm:$0xff] %v56
    // Predicated region
    $region10: #{tpu_custom_call.1} parent=1 // pred_check
      _
    $region11: #{tpu_custom_call.1} parent=1 // pred_check_branch
      %60 = sbr.rel (0) target = $region13
    $region12: #{tpu_custom_call.1} parent=1 // pred_region
      %62 = vsyncadd [#allocation4], 0
      %s64 = sshll.u32 [#allocation5], 4
      %s65 = int_to_ptr.vmem [resolvable:$true] %s64
      %s66 = sshll.u32 %s1, 4
      %s67 = int_to_ptr.hbm [resolvable:$true] %s66
      %69 = dma.vmem_to_hbm [thread:$0]  %s65, 256, %s67, [#allocation4]
    $region13: #{tpu_custom_call.1} parent=1 // pred_fallthru
      _
    // Predicated region
    $region14: #{tpu_custom_call.1} parent=1 // pred_check
      _
    $region15: #{tpu_custom_call.1} parent=1 // pred_check_branch
      %71 = sbr.rel (0) target = $region17
    $region16: #{tpu_custom_call.1} parent=1 // pred_region
      %73 = dma.done [#allocation4], 256
    $region17: #{tpu_custom_call.1} parent=1 // pred_fallthru
      _
    %74 = vsyncpa [#allocation3], 1
    %75 = vsyncpa [#allocation4], 1

</llo_original>
